<compile_context>
chip_gen: v7x
topology: tpu7x:2x2x1
jax: 0.10.0
libtpu: 0.0.40
codegen_flags: <defaults>
</compile_context>

<pallas_src>
import functools
import math

import jax
import jax.numpy as jnp
from jax import lax
from jax.experimental import pallas as pl
from jax.experimental.pallas import tpu as pltpu


# ----------------------------------------------------------------------------
# helpers
# ----------------------------------------------------------------------------
def _round_up(x, m):
    return (x + m - 1) // m * m


def _pick_tile(dim, prefs):
    """Largest preferred tile that divides `dim`, else the full dimension
    (full-extent blocks are always legal)."""
    for p in prefs:
        if dim >= p and dim % p == 0:
            return p
    return dim


def _default_vmem_limit():
    """~75% of physical VMEM, capped at 100 MiB: ~96 MiB on 128-MiB parts (v5e/v6e),
    ~48 MiB on v7x (64 MiB/TC).  Conservative fallback if the query is unavailable."""
    try:
        cap = int(pltpu.get_tpu_info().vmem_capacity_bytes)
    except Exception:
        cap = 64 * 1024 * 1024
    return int(min(cap * 3 // 4, 100 * 1024 * 1024))


_VMEM_LIMIT = _default_vmem_limit()
_ATTN_VMEM_BUDGET = min(_VMEM_LIMIT // 3, 20 * 1024 * 1024)


# ----------------------------------------------------------------------------
# Kernel 1: tiled dense projection  y = x @ W + b
# ----------------------------------------------------------------------------
def _linear_kernel(x_ref, w_ref, b_ref, o_ref, acc_ref):
    k = pl.program_id(2)

    @pl.when(k == 0)
    def _():
        acc_ref[...] = jnp.zeros(acc_ref.shape, acc_ref.dtype)

    # In-kernel cast (no-op when operands are already bf16): reading f32 activations
    # directly avoids a separate XLA cast pass (read f32 + write bf16 + re-read bf16).
    acc_ref[...] += jnp.dot(
        x_ref[...].astype(jnp.bfloat16),
        w_ref[...].astype(jnp.bfloat16),
        preferred_element_type=jnp.float32,
    )

    @pl.when(k == pl.num_programs(2) - 1)
    def _():
        o_ref[...] = (acc_ref[...] + b_ref[...]).astype(o_ref.dtype)


def pallas_linear(x2d, w, b, *, out_dtype=jnp.bfloat16):
    """y = x @ W + b.  x: [M, K] (f32/bf16, cast in-kernel), W: [K, N] (ideally bf16),
    b: [N] f32.  K-tiled grid, f32 VMEM accumulator, bias added at the K finalize."""
    M, K = x2d.shape
    Kw, N = w.shape
    assert K == Kw and b.shape == (N,)

    prefs = (512, 256, 128)
    # Harden ragged / oversized M (= B*S): pad rows to a 128 multiple so a real tile
    # exists instead of a huge full-extent block; pad is sliced off below.
    Mp = M
    if M % 8 != 0 or (M > 1024 and _pick_tile(M, prefs) == M):
        Mp = _round_up(M, 128)
        x2d = jnp.pad(x2d, ((0, Mp - M), (0, 0)))

    tm = _pick_tile(Mp, prefs)
    tn = _pick_tile(N, prefs)
    tk = _pick_tile(K, prefs)
    # v7x megacore: expose >= 2 blocks on a parallel axis when the grid would
    # otherwise collapse to a single program.
    if Mp // tm == 1 and N // tn == 1 and tm % 16 == 0:
        tm //= 2
    grid = (Mp // tm, N // tn, K // tk)

    out = pl.pallas_call(
        _linear_kernel,
        out_shape=jax.ShapeDtypeStruct((Mp, N), out_dtype),
        grid_spec=pltpu.PrefetchScalarGridSpec(
            num_scalar_prefetch=0,
            grid=grid,
            in_specs=[
                pl.BlockSpec((tm, tk), lambda i, j, k: (i, k)),
                pl.BlockSpec((tk, tn), lambda i, j, k: (k, j)),
                pl.BlockSpec((1, tn), lambda i, j, k: (0, j)),
            ],
            out_specs=pl.BlockSpec((tm, tn), lambda i, j, k: (i, j)),
            scratch_shapes=[pltpu.VMEM((tm, tn), jnp.float32)],
        ),
        compiler_params=pltpu.CompilerParams(
            dimension_semantics=("parallel", "parallel", "arbitrary"),
            vmem_limit_bytes=_VMEM_LIMIT,
        ),
    )(x2d, w, b.reshape(1, N).astype(jnp.float32))
    return out[:M] if Mp != M else out


# ----------------------------------------------------------------------------
# Kernel 2: flash-style scaled dot-product attention on token-major activations.
#   q/k/v blocks: (1, tile, G*d_k) slices of [B, S, W] (W = H*d_k or 3*H*d_k for a
#   fused QKV tensor); heads are peeled with static lane slices in-kernel, so no
#   [B, H, S, d_k] transpose ever exists in HBM.
# ----------------------------------------------------------------------------
def _flash_attn_kernel(q_ref, k_ref, v_ref, o_ref, m_sc, l_sc, acc_sc, *, g_heads, d_k):
    ki = pl.program_id(3)

    @pl.when(ki == 0)
    def _():
        m_sc[...] = jnp.full(m_sc.shape, -jnp.inf, m_sc.dtype)
        l_sc[...] = jnp.zeros(l_sc.shape, l_sc.dtype)
        acc_sc[...] = jnp.zeros(acc_sc.shape, acc_sc.dtype)

    # Static unroll over the head group.  The 1/sqrt(d_k) scale is pre-folded into
    # the Q projection weights, so there is no per-step rescale here.
    for g in range(g_heads):
        lo = g * d_k
        qg = q_ref[0, :, lo:lo + d_k]          # (tq, d_k) bf16
        kg = k_ref[0, :, lo:lo + d_k]          # (tk, d_k) bf16
        vg = v_ref[0, :, lo:lo + d_k]          # (tk, d_k) bf16

        # q @ k^T without materializing a transpose (contract the last dims).
        s = lax.dot_general(qg, kg, (((1,), (1,)), ((), ())),
                            preferred_element_type=jnp.float32)        # (tq, tk) f32

        m_prev = m_sc[g]                                               # (tq, 1)
        m_new = jnp.maximum(m_prev, jnp.max(s, axis=-1, keepdims=True))
        alpha = jnp.exp(m_prev - m_new)
        p = jnp.exp(s - m_new)                                         # (tq, tk) f32

        l_sc[g] = alpha * l_sc[g] + jnp.sum(p, axis=-1, keepdims=True)
        acc_sc[g] = alpha * acc_sc[g] + jnp.dot(
            p.astype(vg.dtype), vg, preferred_element_type=jnp.float32)
        m_sc[g] = m_new

    @pl.when(ki == pl.num_programs(3) - 1)
    def _():
        # Normalize and write each head into its d_k-wide lane slot of the lane-dense
        # (tq, G*d_k) output block.  The HBM writeback DMAs the whole dense block; only
        # these finalize stores are sub-128-lane and they run once per S/tk inner steps.
        for g in range(g_heads):
            inv = pl.reciprocal(l_sc[g], approx=False)   # exact; off the MXU path
            o_ref[0, :, g * d_k:(g + 1) * d_k] = (acc_sc[g] * inv).astype(o_ref.dtype)


def _attn_vmem_estimate(g, d_k, tq, tk):
    io = 8 * (tq + tk) * g * d_k          # double-buffered bf16 q/out + k/v blocks
    scratch = 4 * g * (tq * d_k + 2 * tq)  # f32 acc + m + l
    temps = 16 * tq * tk                   # a few live f32 (tq, tk) temporaries
    return io + scratch + temps


def _pick_head_group(num_heads, d_k, *, allow_full, tq, tk):
    """Largest head group G (divisor of H) whose G*d_k lane block is legal
    (multiple of 128, or the full head span) and fits the attention VMEM budget."""
    divisors = [g for g in range(num_heads, 0, -1) if num_heads % g == 0]
    legal = [g for g in divisors
             if (g * d_k) % 128 == 0 or (allow_full and g == num_heads)]
    if not legal:
        raise ValueError("no legal head grouping: fused-QKV consumption needs "
                         "d_model % 128 == 0")
    for g in legal:
        if _attn_vmem_estimate(g, d_k, tq, tk) <= _ATTN_VMEM_BUDGET:
            return g
    return legal[-1]


def pallas_flash_attention(q, k, v, *, num_heads, d_k, col_offsets=(0, 0, 0),
                           tq=None, tk=None, out_dtype=jnp.bfloat16):
    """q/k/v: [B, S, W] bf16 token-major activations; head h of input t lives in
    columns col_offsets[t] + h*d_k : col_offsets[t] + (h+1)*d_k.
    Returns softmax(q k^T) v as [B, S_q, num_heads*d_k] (scale pre-folded into q)."""
    B, Sq, Wq = q.shape
    Sk = k.shape[1]
    assert k.shape[0] == B and v.shape[0] == B and v.shape[1] == Sk
    D = num_heads * d_k

    # tq=256 / tk up to 512 is generation-safe (fits the v7x 64 MiB budget); bump tq
    # on 128 MiB parts only after re-budgeting.
    tq = tq if tq is not None else _pick_tile(Sq, (256, 128))
    tk = tk if tk is not None else _pick_tile(Sk, (512, 256, 128))
    assert Sq % tq == 0 and Sk % tk == 0

    allow_full = (Wq == D and k.shape[2] == D and v.shape[2] == D
                  and all(c == 0 for c in col_offsets))
    G = _pick_head_group(num_heads, d_k, allow_full=allow_full, tq=tq, tk=tk)
    gw = G * d_k
    assert all(c % gw == 0 for c in col_offsets)
    qb0, kb0, vb0 = (c // gw for c in col_offsets)

    grid = (B, num_heads // G, Sq // tq, Sk // tk)
    kern = functools.partial(_flash_attn_kernel, g_heads=G, d_k=d_k)

    return pl.pallas_call(
        kern,
        out_shape=jax.ShapeDtypeStruct((B, Sq, D), out_dtype),
        grid_spec=pltpu.PrefetchScalarGridSpec(
            num_scalar_prefetch=0,
            grid=grid,
            in_specs=[
                pl.BlockSpec((1, tq, gw), lambda b, hg, qi, ki: (b, qi, qb0 + hg)),
                pl.BlockSpec((1, tk, gw), lambda b, hg, qi, ki: (b, ki, kb0 + hg)),
                pl.BlockSpec((1, tk, gw), lambda b, hg, qi, ki: (b, ki, vb0 + hg)),
            ],
            out_specs=pl.BlockSpec((1, tq, gw), lambda b, hg, qi, ki: (b, qi, hg)),
            scratch_shapes=[
                pltpu.VMEM((G, tq, 1), jnp.float32),    # running max
                pltpu.VMEM((G, tq, 1), jnp.float32),    # running sum
                pltpu.VMEM((G, tq, d_k), jnp.float32),  # output accumulator
            ],
        ),
        compiler_params=pltpu.CompilerParams(
            dimension_semantics=("parallel", "parallel", "parallel", "arbitrary"),
            vmem_limit_bytes=_VMEM_LIMIT,
        ),
    )(q, k, v)


# ----------------------------------------------------------------------------
# Parameter prep (one-time, outside the per-step forward)
# ----------------------------------------------------------------------------
def prepare_params(params, h, d_k):
    """Fold the 1/sqrt(d_k) attention scale into the Q projection (in f32, before the
    bf16 cast), cast all weights to bf16 once, and pre-build the fused QKV weight."""
    scale = 1.0 / math.sqrt(d_k)
    wq = (params["wq"] * scale).astype(jnp.float32)
    bq = (params["bq"] * scale).astype(jnp.float32)
    return {
        "wq": wq.astype(jnp.bfloat16), "bq": bq,
        "wk": params["wk"].astype(jnp.bfloat16), "bk": params["bk"].astype(jnp.float32),
        "wv": params["wv"].astype(jnp.bfloat16), "bv": params["bv"].astype(jnp.float32),
        "wo": params["wo"].astype(jnp.bfloat16), "bo": params["bo"].astype(jnp.float32),
        "wqkv": jnp.concatenate(
            [wq, params["wk"], params["wv"]], axis=1).astype(jnp.bfloat16),
        "bqkv": jnp.concatenate(
            [bq, params["bk"], params["bv"]]).astype(jnp.float32),
    }


# ----------------------------------------------------------------------------
# MultiHeadedAttention forward (mask=None path, dropout in eval mode)
# ----------------------------------------------------------------------------
def multi_headed_attention(prep, query, key, value, h, d_k, *,
                           attn_tq=None, attn_tk=None):
    """query/key/value: [B, S, D] with D = h*d_k.  Returns [B, S, D] in query.dtype."""
    # TODO(synk): mask and p_attn dropout are not implemented (mask=None / eval mode).
    B, S, D = query.shape
    assert D == h * d_k

    def flat(x):
        return x.reshape(x.shape[0] * x.shape[1], x.shape[2])

    # NOTE: identity check only — logically-equal-but-distinct tracers fall back to
    # the (still correct) separate-projection path.
    if (query is key) and (key is value):
        # Fused QKV projection: x is read from HBM once, one wide GEMM.
        qkv = pallas_linear(flat(query), prep["wqkv"], prep["bqkv"])     # [B*S, 3D] bf16
        qkv3 = qkv.reshape(B, S, 3 * D)
        if D % 128 == 0:
            # Consume the fused tensor in place: Q/K/V column offsets are folded into
            # the BlockSpec index maps (no split copy, no head transpose in HBM).
            x = pallas_flash_attention(qkv3, qkv3, qkv3, num_heads=h, d_k=d_k,
                                       col_offsets=(0, D, 2 * D),
                                       tq=attn_tq, tk=attn_tk)
        else:
            q3 = qkv3[..., 0 * D:1 * D]
            k3 = qkv3[..., 1 * D:2 * D]
            v3 = qkv3[..., 2 * D:3 * D]
            x = pallas_flash_attention(q3, k3, v3, num_heads=h, d_k=d_k,
                                       tq=attn_tq, tk=attn_tk)
    else:
        q3 = pallas_linear(flat(query), prep["wq"], prep["bq"]).reshape(B, S, D)
        k3 = pallas_linear(flat(key), prep["wk"], prep["bk"]).reshape(
            key.shape[0], key.shape[1], D)
        v3 = pallas_linear(flat(value), prep["wv"], prep["bv"]).reshape(
            value.shape[0], value.shape[1], D)
        x = pallas_flash_attention(q3, k3, v3, num_heads=h, d_k=d_k,
                                   tq=attn_tq, tk=attn_tk)

    out = pallas_linear(x.reshape(B * S, D), prep["wo"], prep["bo"],
                        out_dtype=query.dtype)
    return out.reshape(B, S, D)


# ----------------------------------------------------------------------------
# Pure-JAX f32 reference (mirrors the PyTorch module with mask=None, eval mode)
# ----------------------------------------------------------------------------
def reference_mha(params, query, key, value, h, d_k):
    B, S, D = query.shape

    def proj(x, w, b):
        Bx, Sx, _ = x.shape
        y = x.reshape(Bx * Sx, D) @ w + b
        return y.reshape(Bx, Sx, h, d_k).transpose(0, 2, 1, 3)

    q = proj(query, params["wq"], params["bq"])
    k = proj(key, params["wk"], params["bk"])
    v = proj(value, params["wv"], params["bv"])
    s = jnp.einsum("bhqd,bhkd->bhqk", q, k) / math.sqrt(d_k)
    p = jax.nn.softmax(s, axis=-1)
    x = jnp.einsum("bhqk,bhkd->bhqd", p, v)
    x = x.transpose(0, 2, 1, 3).reshape(B * S, h * d_k)
    return (x @ params["wo"] + params["bo"]).reshape(B, S, D)


# ----------------------------------------------------------------------------
# Deterministic parameter init (PyTorch nn.Linear-style uniform bounds)
# ----------------------------------------------------------------------------
def init_params(key, d_model):
    bound = 1.0 / math.sqrt(d_model)
    params = {}
    keys = jax.random.split(key, 8)
    for i, n in enumerate(["q", "k", "v", "o"]):
        params[f"w{n}"] = jax.random.uniform(
            keys[2 * i], (d_model, d_model), jnp.float32, -bound, bound)
        params[f"b{n}"] = jax.random.uniform(
            keys[2 * i + 1], (d_model,), jnp.float32, -bound, bound)
    return params


if __name__ == "__main__":
    root = jax.random.PRNGKey(0)
    kp, kq, kk, kv, kp3 = jax.random.split(root, 5)

    # --- Test 1: cross-attention path (three separate projections), B=2,S=8,D=32,H=4.
    B, S, D, H = 2, 8, 32, 4
    d_k = D // H
    params = init_params(kp, D)
    prep = prepare_params(params, H, d_k)
    query = jax.random.normal(kq, (B, S, D), jnp.float32)
    key_in = jax.random.normal(kk, (B, S, D), jnp.float32)
    value = jax.random.normal(kv, (B, S, D), jnp.float32)

    out = jax.block_until_ready(
        multi_headed_attention(prep, query, key_in, value, H, d_k))
    assert out.shape == (B, S, D)
    ref = reference_mha(params, query, key_in, value, H, d_k)
    assert float(jnp.max(jnp.abs(out - ref))) < 5e-2

    # --- Test 2: self-attention, fused QKV GEMM + split fallback (D % 128 != 0).
    out_self = jax.block_until_ready(
        multi_headed_attention(prep, query, query, query, H, d_k))
    ref_self = reference_mha(params, query, query, query, H, d_k)
    assert float(jnp.max(jnp.abs(out_self - ref_self))) < 5e-2

    # --- Test 3: self-attention with D=128: fused QKV consumed in place via column
    #     offsets; small tq/tk override exercises the multi-block online softmax.
    B3, S3, D3, H3 = 2, 16, 128, 2
    d_k3 = D3 // H3
    params3 = init_params(kp3, D3)
    prep3 = prepare_params(params3, H3, d_k3)
    q3 = jax.random.normal(jax.random.PRNGKey(1), (B3, S3, D3), jnp.float32)
    out3 = jax.block_until_ready(
        multi_headed_attention(prep3, q3, q3, q3, H3, d_k3, attn_tq=8, attn_tk=8))
    ref3 = reference_mha(params3, q3, q3, q3, H3, d_k3)
    assert out3.shape == (B3, S3, D3)
    assert float(jnp.max(jnp.abs(out3 - ref3))) < 5e-2

    print("KERNEL_OK")
</pallas_src>

<mosaic_0001>
module attributes {stable_mosaic.version = 11 : i64} {
  func.func @_linear_kernel(%arg0: i32, %arg1: i32, %arg2: i32, %arg3: memref<8x32xf32, #tpu.memory_space<vmem>>, %arg4: memref<32x32xbf16, #tpu.memory_space<vmem>>, %arg5: memref<1x32xf32, #tpu.memory_space<vmem>>, %arg6: memref<8x32xbf16, #tpu.memory_space<vmem>>, %arg7: memref<8x32xf32, #tpu.memory_space<vmem>>) attributes {dimension_semantics = [#tpu.dimension_semantics<parallel>, #tpu.dimension_semantics<parallel>, #tpu.dimension_semantics<arbitrary>], iteration_bounds = array<i64: 2, 1, 1>, scalar_prefetch = 0 : i64, scratch_operands = 1 : i64, tpu.core_type = #tpu.core_type<tc>, window_params = [{transform_indices = @transform_0, window_bounds = array<i64: 8, 32>}, {transform_indices = @transform_1, window_bounds = array<i64: 32, 32>}, {transform_indices = @transform_2, window_bounds = array<i64: 1, 32>}, {transform_indices = @transform_3, window_bounds = array<i64: 8, 32>}]} {
    %c0_i32 = arith.constant 0 : i32
    %0 = arith.cmpi eq, %arg2, %c0_i32 : i32
    %1 = arith.extui %0 : i1 to i32
    %c0_i32_0 = arith.constant 0 : i32
    %2 = arith.cmpi ne, %1, %c0_i32_0 : i32
    scf.if %2 {
      %cst_10 = arith.constant 0.000000e+00 : f32
      %13 = vector.broadcast %cst_10 : f32 to vector<8x32xf32>
      %c0_11 = arith.constant 0 : index
      %c0_12 = arith.constant 0 : index
      %14 = vector.load %arg7[%c0_11, %c0_12] : memref<8x32xf32, #tpu.memory_space<vmem>>, vector<8x32xf32>
      tpu.vector_store %arg7[%c0_11, %c0_12], %13 {strides = array<i32>} : memref<8x32xf32, #tpu.memory_space<vmem>>, vector<8x32xf32>,
    } else {
    }
    %c0 = arith.constant 0 : index
    %c0_1 = arith.constant 0 : index
    %3 = vector.load %arg7[%c0, %c0_1] : memref<8x32xf32, #tpu.memory_space<vmem>>, vector<8x32xf32>
    %c0_2 = arith.constant 0 : index
    %c0_3 = arith.constant 0 : index
    %4 = vector.load %arg3[%c0_2, %c0_3] : memref<8x32xf32, #tpu.memory_space<vmem>>, vector<8x32xf32>
    %5 = arith.truncf %4 : vector<8x32xf32> to vector<8x32xbf16>
    %c0_4 = arith.constant 0 : index
    %c0_5 = arith.constant 0 : index
    %6 = vector.load %arg4[%c0_4, %c0_5] : memref<32x32xbf16, #tpu.memory_space<vmem>>, vector<32x32xbf16>
    %cst = arith.constant dense<0.000000e+00> : vector<8x32xf32>
    %7 = tpu.matmul %5, %6, %cst {dimension_numbers = #tpu.dot_dimension_numbers<[1], [0], [0], [1], [0, 0, 1, 1], [], []>} : vector<8x32xbf16>, vector<32x32xbf16>, vector<8x32xf32> -> vector<8x32xf32>
    %8 = arith.addf %3, %7 : vector<8x32xf32>
    %c0_6 = arith.constant 0 : index
    %c0_7 = arith.constant 0 : index
    %9 = vector.load %arg7[%c0_6, %c0_7] : memref<8x32xf32, #tpu.memory_space<vmem>>, vector<8x32xf32>
    tpu.vector_store %arg7[%c0_6, %c0_7], %8 {strides = array<i32>} : memref<8x32xf32, #tpu.memory_space<vmem>>, vector<8x32xf32>,
    %c0_i32_8 = arith.constant 0 : i32
    %10 = arith.cmpi eq, %arg2, %c0_i32_8 : i32
    %11 = arith.extui %10 : i1 to i32
    %c0_i32_9 = arith.constant 0 : i32
    %12 = arith.cmpi ne, %11, %c0_i32_9 : i32
    scf.if %12 {
      %c0_10 = arith.constant 0 : index
      %c0_11 = arith.constant 0 : index
      %13 = vector.load %arg7[%c0_10, %c0_11] : memref<8x32xf32, #tpu.memory_space<vmem>>, vector<8x32xf32>
      %c0_12 = arith.constant 0 : index
      %c0_13 = arith.constant 0 : index
      %14 = vector.load %arg5[%c0_12, %c0_13] : memref<1x32xf32, #tpu.memory_space<vmem>>, vector<1x32xf32>
      %15 = vector.broadcast %14 : vector<1x32xf32> to vector<8x32xf32>
      %16 = arith.addf %13, %15 : vector<8x32xf32>
      %17 = arith.truncf %16 : vector<8x32xf32> to vector<8x32xbf16>
      %c0_14 = arith.constant 0 : index
      %c0_15 = arith.constant 0 : index
      %18 = vector.load %arg6[%c0_14, %c0_15] : memref<8x32xbf16, #tpu.memory_space<vmem>>, vector<8x32xbf16>
      tpu.vector_store %arg6[%c0_14, %c0_15], %17 {strides = array<i32>} : memref<8x32xbf16, #tpu.memory_space<vmem>>, vector<8x32xbf16>,
    } else {
    }
    return
  }
  func.func @transform_0(%arg0: i32, %arg1: i32, %arg2: i32) -> (i32, i32) {
    %c0_i32 = arith.constant 0 : i32
    return %arg0, %arg2 : i32, i32
  }
  func.func @transform_1(%arg0: i32, %arg1: i32, %arg2: i32) -> (i32, i32) {
    %c0_i32 = arith.constant 0 : i32
    return %arg2, %arg1 : i32, i32
  }
  func.func @transform_2(%arg0: i32, %arg1: i32, %arg2: i32) -> (i32, i32) {
    %c0_i32 = arith.constant 0 : i32
    %c0_i32_0 = arith.constant 0 : i32
    return %c0_i32, %arg1 : i32, i32
  }
  func.func @transform_3(%arg0: i32, %arg1: i32, %arg2: i32) -> (i32, i32) {
    %c0_i32 = arith.constant 0 : i32
    return %arg0, %arg1 : i32, i32
  }
}

</mosaic_0001>

<llo_original>
// kernel: tpu_custom_call.1
$region0: #{tpu_custom_call.1}
  #allocation0 [shape = 'u32[]', space=smem, size = 0x4, offset = 0x4, fixed_abs, tag = 'smem constant byte address 0x4 - core index']
  #allocation1 [shape = 'u32[144,128]{1,0:T(1,128)}', space=vmem, size = 0x12000, scoped, tag = 'internal scratch']
  #allocation2 [shape = 'f32[8,32]{1,0:T(8,128)}', space=vmem, size = 0x1000, scoped, tag = 'scratch operand']
  %s0 = inlined_call_operand.hbm [shape: f32[16,32], index: 0, kind: input, shape index: {}]
  %s1 = inlined_call_operand.hbm [shape: bf16[32,32], index: 1, kind: input, shape index: {}]
  %s2 = inlined_call_operand.vmem [shape: f32[1,32], index: 2, kind: input, shape index: {}]
  %s3 = inlined_call_operand.hbm [shape: bf16[16,32], index: 3, kind: output, shape index: {}]
  %s4 = sld [smem:[#allocation0]]
  $region61: #{tpu_custom_call.1} parent=0
    _
  %s6 = ssub.s32 1, %s4
  %s7 = scalar_select 0, %s6, %s4
  $region1: #{tpu_custom_call.1} parent=0
    #allocation3 [shape = 'u8[8192]{0}', space=vmem, size = 0x2000, scoped, tag = 'input window, operand 0']
    #allocation4 [shape = 's32[2]{0}', space=sflag, size = 0x8, scoped, tag = 'scoped memory for tpu_custom_call.1']
    #allocation5 [shape = 's32[2]{0}', space=sflag, size = 0x8, scoped, tag = 'scoped memory for tpu_custom_call.1']
    #allocation6 [shape = 'u8[8192]{0}', space=vmem, size = 0x2000, scoped, tag = 'input window, operand 1, single buffered']
    #allocation7 [shape = 's32[1]{0}', space=sflag, size = 0x4, scoped, tag = 'scoped memory for tpu_custom_call.1']
    #allocation8 [shape = 'u8[4096]{0}', space=vmem, size = 0x1000, scoped, tag = 'output window, operand 0']
    %8 = vsyncpa [#allocation4], 0
    %s9 = scalar_lea.sflag [#allocation4], 1
    %10 = vsyncpa %s9, 0
    %11 = vsyncpa [#allocation7], 0
    %12 = vsyncpa [#allocation5], 0
    %s13 = scalar_lea.sflag [#allocation5], 1
    %14 = vsyncpa %s13, 0
    loop: start=0, step=1, limit=4
    $region2: #{tpu_custom_call.1} parent=1 // loop_pre_header
      _
    $region3: #{tpu_custom_call.1} parent=1 // loop_header
      %s16 = sphi 0, %s20
      %p17 = scmp.ge.s32.totalorder %s16, 4
      %s23 = sphi 0, %s42
      %s24 = sphi 0, %s38
      %s25 = sphi 0, %s34
      %s26 = sphi 0, %s23
      %s27 = sphi 0, %s24
      %s28 = sphi 0, %s25
      %s29 = sphi 0, %s26
      %s30 = sphi 0, %s27
      %s31 = sphi 0, %s28
      %s47 = sphi 0, %s49
      %s50 = sphi 0, %s47
      %s51 = sphi 0, %s50
      %s67 = sphi 0, %s51
      %s75 = sphi 0, %s77
      %s78 = sphi 0, %s75
      %s79 = sphi 0, %s78
      %s95 = sphi 0, %s79
      %s101 = sphi 0, %s103
      %s104 = sphi 0, %s101
      %s105 = sphi 0, %s104
      %s121 = sphi 0, %s105
      %s129 = sphi 0, %s131
      %s132 = sphi 0, %s129
      %s133 = sphi 0, %s132
      %s149 = sphi 0, %s133
    $region4: #{tpu_custom_call.1} parent=1 // loop_header_branch
      %19 = sbr.rel (%p17) target = $region8
    $region5: #{tpu_custom_call.1} parent=1 // loop_body
      %s21 = ssub.s32 %s16, 1
      %s22 = ssub.s32 %s16, 2
      %s32 = sadd.s32 1, %s25
      %p33 = scmp.ge.s32.totalorder %s32, 1
      %s34 = scalar_select %p33, 0, %s32
      %s35 = sadd.s32 1, %s24
      %s36 = scalar_select %p33, %s35, %s24
      %p37 = scmp.ge.s32.totalorder %s36, 1
      %s38 = scalar_select %p37, 0, %s36
      %s39 = sadd.s32 1, %s23
      %s40 = scalar_select %p37, %s39, %s23
      %p41 = scmp.ge.s32.totalorder %s40, 2
      %s42 = scalar_select %p41, 0, %s40
      %s43 = ssub.s32 %s23, %s42
      %s44 = ssub.s32 %s25, %s34
      %s45 = sor.u32 %s43, %s44
      %p46 = scmp.eq.s32.totalorder %s45, 0
      %s48 = sadd.s32 %s47, 1
      %s49 = scalar_select %p46, %s47, %s48
      %p52 = pneg %p46
      %p53 = scmp.eq.s32.totalorder %s16, 1
      %p54 = por %p52, %p53
      %p55 = scmp.ne.s32.totalorder %s47, %s50
      %p56 = scmp.eq.s32.totalorder %s16, 0
      %p57 = por %p55, %p56
      %p58 = scmp.ne.s32.totalorder %s47, %s50
      %p59 = scmp.eq.s32.totalorder %s21, 1
      %p60 = por %p58, %p59
      %p61 = scmp.ne.s32.totalorder %s50, %s51
      %p62 = scmp.eq.s32.totalorder %s21, 0
      %p63 = por %p61, %p62
      %p64 = scmp.ne.s32.totalorder %s50, %s51
      %p65 = scmp.eq.s32.totalorder %s22, 1
      %p66 = por %p64, %p65
      %p68 = scmp.ne.s32.totalorder %s51, %s67
      %p69 = scmp.eq.s32.totalorder %s22, 0
      %p70 = por %p68, %p69
      %s71 = ssub.s32 %s25, %s34
      %s72 = ssub.s32 %s24, %s38
      %s73 = sor.u32 %s71, %s72
      %p74 = scmp.eq.s32.totalorder %s73, 0
      %s76 = sadd.s32 %s75, 1
      %s77 = scalar_select %p74, %s75, %s76
      %p80 = pneg %p74
      %p81 = scmp.eq.s32.totalorder %s16, 1
      %p82 = por %p80, %p81
      %p83 = scmp.ne.s32.totalorder %s75, %s78
      %p84 = scmp.eq.s32.totalorder %s16, 0
      %p85 = por %p83, %p84
      %p86 = scmp.ne.s32.totalorder %s75, %s78
      %p87 = scmp.eq.s32.totalorder %s21, 1
      %p88 = por %p86, %p87
      %p89 = scmp.ne.s32.totalorder %s78, %s79
      %p90 = scmp.eq.s32.totalorder %s21, 0
      %p91 = por %p89, %p90
      %p92 = scmp.ne.s32.totalorder %s78, %s79
      %p93 = scmp.eq.s32.totalorder %s22, 1
      %p94 = por %p92, %p93
      %p96 = scmp.ne.s32.totalorder %s79, %s95
      %p97 = scmp.eq.s32.totalorder %s22, 0
      %p98 = por %p96, %p97
      %s99 = ssub.s32 %s24, %s38
      %p100 = scmp.eq.s32.totalorder %s99, 0
      %s102 = sadd.s32 %s101, 1
      %s103 = scalar_select %p100, %s101, %s102
      %p106 = pneg %p100
      %p107 = scmp.eq.s32.totalorder %s16, 1
      %p108 = por %p106, %p107
      %p109 = scmp.ne.s32.totalorder %s101, %s104
      %p110 = scmp.eq.s32.totalorder %s16, 0
      %p111 = por %p109, %p110
      %p112 = scmp.ne.s32.totalorder %s101, %s104
      %p113 = scmp.eq.s32.totalorder %s21, 1
      %p114 = por %p112, %p113
      %p115 = scmp.ne.s32.totalorder %s104, %s105
      %p116 = scmp.eq.s32.totalorder %s21, 0
      %p117 = por %p115, %p116
      %p118 = scmp.ne.s32.totalorder %s104, %s105
      %p119 = scmp.eq.s32.totalorder %s22, 1
      %p120 = por %p118, %p119
      %p122 = scmp.ne.s32.totalorder %s105, %s121
      %p123 = scmp.eq.s32.totalorder %s22, 0
      %p124 = por %p122, %p123
      %s125 = ssub.s32 %s23, %s42
      %s126 = ssub.s32 %s24, %s38
      %s127 = sor.u32 %s125, %s126
      %p128 = scmp.eq.s32.totalorder %s127, 0
      %s130 = sadd.s32 %s129, 1
      %s131 = scalar_select %p128, %s129, %s130
      %p134 = pneg %p128
      %p135 = scmp.eq.s32.totalorder %s16, 1
      %p136 = por %p134, %p135
      %p137 = scmp.ne.s32.totalorder %s129, %s132
      %p138 = scmp.eq.s32.totalorder %s16, 0
      %p139 = por %p137, %p138
      %p140 = scmp.ne.s32.totalorder %s129, %s132
      %p141 = scmp.eq.s32.totalorder %s21, 1
      %p142 = por %p140, %p141
      %p143 = scmp.ne.s32.totalorder %s132, %s133
      %p144 = scmp.eq.s32.totalorder %s21, 0
      %p145 = por %p143, %p144
      %p146 = scmp.ne.s32.totalorder %s132, %s133
      %p147 = scmp.eq.s32.totalorder %s22, 1
      %p148 = por %p146, %p147
      %p150 = scmp.ne.s32.totalorder %s133, %s149
      %p151 = scmp.eq.s32.totalorder %s22, 0
      %p152 = por %p150, %p151
      %p153 = scmp.le.s32.totalorder 1, %s16
      %p154 = scmp.lt.s32.totalorder %s16, 3
      %p155 = pnand %p153, %p154
      %p156 = pneg %p155
      // Predicated region
      $region9: #{tpu_custom_call.1} parent=5 // pred_check
        _
      $region10: #{tpu_custom_call.1} parent=5 // pred_check_branch
        %158 = sbr.rel (%p155) target = $region12
      $region11: #{tpu_custom_call.1} parent=5 // pred_region
        %s159 = ssub.s32 %s16, 1
        // Predicated region
        $region13: #{tpu_custom_call.1} parent=11 // pred_check
          %p160 = pneg %p91
        $region14: #{tpu_custom_call.1} parent=11 // pred_check_branch
          %162 = sbr.rel (%p160) target = $region16
        $region15: #{tpu_custom_call.1} parent=11 // pred_region
          %s163 = smul.u32 4, %s28
          %s165 = ssub.s32 256, 256
          %166 = vsyncadd [#allocation7], %s165
          %s167 = sadd.s32 %s27, %s163
          %s168 = smul.addr %s167, 64
          %s169 = scalar_lea.hbm %s1, %s168
          %s170 = sshll.u32 [#allocation6], 4
          %s171 = int_to_ptr.vmem [resolvable:$true] %s170
          %176 = dma.hbm_to_vmem [thread:$0]  %s169, 256, %s171, [#allocation7], 64, 64, 4
        $region16: #{tpu_custom_call.1} parent=11 // pred_fallthru
          _
        // Predicated region
        $region17: #{tpu_custom_call.1} parent=11 // pred_check
          %p177 = pneg %p117
        $region18: #{tpu_custom_call.1} parent=11 // pred_check_branch
          %179 = sbr.rel (%p177) target = $region20
        $region19: #{tpu_custom_call.1} parent=11 // pred_region
          %p180 = scmp.lt.s32.totalorder %s27, 0
          %s181 = scalar_select %p180, %s27, 0
          %s182 = scalar_lea.vmem %s2, %s181
        $region20: #{tpu_custom_call.1} parent=11 // pred_fallthru
          _
      $region12: #{tpu_custom_call.1} parent=5 // pred_fallthru
        _
      %p183 = scmp.lt.s32.totalorder %s16, 2
      // Predicated region
      $region21: #{tpu_custom_call.1} parent=5 // pred_check
        %p184 = pneg %p183
      $region22: #{tpu_custom_call.1} parent=5 // pred_check_branch
        %186 = sbr.rel (%p184) target = $region24
      $region23: #{tpu_custom_call.1} parent=5 // pred_region
        // Predicated region
        $region25: #{tpu_custom_call.1} parent=23 // pred_check
          %p187 = pneg %p57
        $region26: #{tpu_custom_call.1} parent=23 // pred_check_branch
          %189 = sbr.rel (%p187) target = $region28
        $region27: #{tpu_custom_call.1} parent=23 // pred_region
          %s190 = sand.u32 %s47, 1
          %s191 = scalar_lea.sflag [#allocation4], %s190
          %s192 = sand.u32 %s47, 1
          %s193 = smul.addr %s192, 8
          %s194 = scalar_lea.vmem [#allocation3], %s193
          %s196 = ssub.s32 128, 128
          %197 = vsyncadd %s191, %s196
          %s198 = sadd.s32 %s25, %s23
          %s199 = smul.addr %s198, 128
          %s200 = scalar_lea.hbm %s0, %s199
          %s202 = sshll.u32 %s194, 4
          %s203 = int_to_ptr.vmem [resolvable:$true] %s202
          %205 = dma.hbm_to_vmem [thread:$0]  %s200, 128, %s203, %s191
        $region28: #{tpu_custom_call.1} parent=23 // pred_fallthru
          _
      $region24: #{tpu_custom_call.1} parent=5 // pred_fallthru
        _
      %p206 = scmp.le.s32.totalorder 1, %s16
      %p207 = scmp.lt.s32.totalorder %s16, 3
      %p208 = pnand %p206, %p207
      %p209 = pneg %p208
      // Predicated region
      $region29: #{tpu_custom_call.1} parent=5 // pred_check
        _
      $region30: #{tpu_custom_call.1} parent=5 // pred_check_branch
        %211 = sbr.rel (%p208) target = $region32
      $region31: #{tpu_custom_call.1} parent=5 // pred_region
        %s212 = ssub.s32 %s16, 1
        %s213 = sand.u32 %s50, 1
        %s214 = scalar_lea.sflag [#allocation4], %s213
        %s215 = sand.u32 %s50, 1
        %s216 = smul.addr %s215, 8
        %s217 = scalar_lea.vmem [#allocation3], %s216
        // Predicated region
        $region33: #{tpu_custom_call.1} parent=31 // pred_check
          %p218 = pneg %p63
        $region34: #{tpu_custom_call.1} parent=31 // pred_check_branch
          %220 = sbr.rel (%p218) target = $region36
        $region35: #{tpu_custom_call.1} parent=31 // pred_region
          %221 = dma.done %s214, 128
        $region36: #{tpu_custom_call.1} parent=31 // pred_fallthru
          _
        // Predicated region
        $region37: #{tpu_custom_call.1} parent=31 // pred_check
          %p222 = pneg %p91
        $region38: #{tpu_custom_call.1} parent=31 // pred_check_branch
          %224 = sbr.rel (%p222) target = $region40
        $region39: #{tpu_custom_call.1} parent=31 // pred_region
          %225 = dma.done [#allocation7], 256
        $region40: #{tpu_custom_call.1} parent=31 // pred_fallthru
          _
        %s226 = sand.u32 %s50, 1
        %s227 = scalar_lea.sflag [#allocation4], %s226
        %s228 = sand.u32 %s50, 1
        %s229 = smul.addr %s228, 8
        %s230 = scalar_lea.vmem [#allocation3], %s229
        %p231 = pneg %p63
        %p232 = pneg %p60
        %p233 = pneg %p91
        %p234 = pneg %p88
        %p235 = scmp.lt.s32.totalorder %s27, 0
        %s236 = scalar_select %p235, %s27, 0
        %s237 = scalar_lea.vmem %s2, %s236
        %p238 = pneg %p117
        %p239 = pneg %p114
        %p240 = pneg %p145
        %p241 = pneg %p142
        %s242 = sand.u32 %s132, 1
        %s243 = scalar_lea.sflag [#allocation5], %s242
        %s244 = sand.u32 %s132, 1
        %s245 = smul.addr %s244, 4
        %s246 = scalar_lea.vmem [#allocation8], %s245
        %s247 = smul.u32 4, %s28
        %p248 = scmp.lt.s32.totalorder %s27, 0
        %s249 = scalar_select %p248, %s27, 0
        %s250 = scalar_lea.vmem %s2, %s249
        %p252 = scmp.eq.s32.totalorder %s28, 0
        // Predicated region
        $region41: #{tpu_custom_call.1} parent=31 // pred_check
          %p253 = pneg %p252
        $region42: #{tpu_custom_call.1} parent=31 // pred_check_branch
          %255 = sbr.rel (%p253) target = $region44
        $region43: #{tpu_custom_call.1} parent=31 // pred_region
          %vm256 = vcmask 261120
          %257 = vst.msk [vmem:[#allocation2] sm:$0xff] %vm256, 0.0
        $region44: #{tpu_custom_call.1} parent=31 // pred_fallthru
          _
        %v258 = vld [vmem:[#allocation2] sm:$0xff]
        %v259 = vld [vmem:[%s217] sm:$0xff]
        %v260 = vpack.c.bf16 %v259, %v259
        %v261 = vld [vmem:[#allocation6] sm:$0xf]
        %v262 = vld [vmem:[#allocation6 + $0x4] sm:$0xf]
        %v263 = vld [vmem:[#allocation6 + $0x8] sm:$0xf]
        %v264 = vld [vmem:[#allocation6 + $0xc] sm:$0xf]
        %v269 = vunpack.c.l.b16 %v261
        %v270 = vunpack.c.l.b16 %v262
        %v271 = vunpack.c.l.b16 %v263
        %v272 = vunpack.c.l.b16 %v264
        %v273 = vpack.c.b16 %v270, %v269
        %v274 = vpack.c.b16 %v272, %v271
        %vm277 = vcmask 261120
        %v279 = vsel %vm277, %v260, 0
        %281 = vmatprep.subr.bf16.mxu0 0
        %282 = vmatpush1.bf16.msra.mxu0 %v273
        %283 = vmatprep.subr.bf16.mxu0 0
        %284 = vmatpush1.bf16.msra.mxu0 %v274
        %285 = vmatprep.subr.bf16.mxu0 0
        %286 = vmatpush1.bf16.msra.mxu0 0
        %287 = vmatprep.subr.bf16.mxu0 0
        %288 = vmatpush1.bf16.msra.mxu0 0
        %289 = vmatprep.subr.bf16.mxu0 0
        %290 = vmatpush1.bf16.msra.mxu0 0
        %291 = vmatprep.subr.bf16.mxu0 0
        %292 = vmatpush1.bf16.msra.mxu0 0
        %293 = vmatprep.subr.bf16.mxu0 0
        %294 = vmatpush1.bf16.msra.mxu0 0
        %295 = vmatprep.subr.bf16.mxu0 0
        %296 = vmatpush1.bf16.msra.mxu0 0
        %297 = vmatprep.subr.bf16.mxu0 0
        %298 = vmatpush1.bf16.msra.mxu0 0
        %299 = vmatprep.subr.bf16.mxu0 0
        %300 = vmatpush1.bf16.msra.mxu0 0
        %301 = vmatprep.subr.bf16.mxu0 0
        %302 = vmatpush1.bf16.msra.mxu0 0
        %303 = vmatprep.subr.bf16.mxu0 0
        %304 = vmatpush1.bf16.msra.mxu0 0
        %305 = vmatprep.subr.bf16.mxu0 0
        %306 = vmatpush1.bf16.msra.mxu0 0
        %307 = vmatprep.subr.bf16.mxu0 0
        %308 = vmatpush1.bf16.msra.mxu0 0
        %309 = vmatprep.subr.bf16.mxu0 0
        %310 = vmatpush1.bf16.msra.mxu0 0
        %311 = vmatprep.subr.bf16.mxu0 0
        %312 = vmatpush1.bf16.msra.mxu0 0
        %313 = vmatprep.mubr.bf16.mxu0 0
        %314 = vmatmul.mubr.bf16.gmra.mrb[0].mxu0 %v279
        %v315 = vpop.f32.mrb[0].mxu0
        %v316 = vadd.f32 0.0, %v315
        %v317 = vpop.f32.mrb[0].mxu0
        %v318 = vpop.f32.mrb[0].mxu0
        %v319 = vpop.f32.mrb[0].mxu0
        %320 = vdwg.mxu0
        %v321 = vadd.f32 %v258, %v316
        %322 = vst.msk [vmem:[#allocation2] sm:$0xff] %vm277, %v321
        // Predicated region
        $region45: #{tpu_custom_call.1} parent=31 // pred_check
          %p323 = pneg %p252
        $region46: #{tpu_custom_call.1} parent=31 // pred_check_branch
          %325 = sbr.rel (%p323) target = $region48
        $region47: #{tpu_custom_call.1} parent=31 // pred_region
          %v326 = vld [vmem:[#allocation2] sm:$0xff]
          %v327 = vld [vmem:[%s250] sm:$0x1]
          %v329 = vlaneseq
          %v330 = vshrl.u32 %v329, 7
          %v331 = vsub.s32 0, %v330
          %v332 = vrot.slane %v327, %v331
          %v334 = vadd.f32 %v326, %v332
          %v335 = vpack.c.bf16 %v334, %v334
          %vm336 = vcmask 257024
          %337 = vst.msk [vmem:[%s246] sm:$0xf] %vm336, %v335
        $region48: #{tpu_custom_call.1} parent=31 // pred_fallthru
          _
        %s338 = sand.u32 %s132, 1
        %s339 = scalar_lea.sflag [#allocation5], %s338
        %s340 = sand.u32 %s132, 1
        %s341 = smul.addr %s340, 4
        %s342 = scalar_lea.vmem [#allocation8], %s341
        // Predicated region
        $region49: #{tpu_custom_call.1} parent=31 // pred_check
          %p343 = pneg %p142
        $region50: #{tpu_custom_call.1} parent=31 // pred_check_branch
          %345 = sbr.rel (%p343) target = $region52
        $region51: #{tpu_custom_call.1} parent=31 // pred_region
          %s347 = ssub.s32 64, 64
          %348 = vsyncadd %s339, %s347
          %s349 = sadd.s32 %s27, %s26
          %s350 = smul.addr %s349, 64
          %s351 = scalar_lea.hbm %s3, %s350
          %s353 = sshll.u32 %s342, 4
          %s354 = int_to_ptr.vmem [resolvable:$true] %s353
          %356 = dma.vmem_to_hbm [thread:$0]  %s354, 64, %s351, %s339
        $region52: #{tpu_custom_call.1} parent=31 // pred_fallthru
          _
      $region32: #{tpu_custom_call.1} parent=5 // pred_fallthru
        _
      %p357 = scmp.le.s32.totalorder 2, %s16
      // Predicated region
      $region53: #{tpu_custom_call.1} parent=5 // pred_check
        %p358 = pneg %p357
      $region54: #{tpu_custom_call.1} parent=5 // pred_check_branch
        %360 = sbr.rel (%p358) target = $region56
      $region55: #{tpu_custom_call.1} parent=5 // pred_region
        %s361 = ssub.s32 %s16, 2
        // Predicated region
        $region57: #{tpu_custom_call.1} parent=55 // pred_check
          %p362 = pneg %p148
        $region58: #{tpu_custom_call.1} parent=55 // pred_check_branch
          %364 = sbr.rel (%p362) target = $region60
        $region59: #{tpu_custom_call.1} parent=55 // pred_region
          %s365 = sand.u32 %s133, 1
          %s366 = scalar_lea.sflag [#allocation5], %s365
          %s367 = sand.u32 %s133, 1
          %s368 = smul.addr %s367, 4
          %s369 = scalar_lea.vmem [#allocation8], %s368
          %370 = dma.done %s366, 64
        $region60: #{tpu_custom_call.1} parent=55 // pred_fallthru
          _
      $region56: #{tpu_custom_call.1} parent=5 // pred_fallthru
        _
    $region6: #{tpu_custom_call.1} parent=1 // loop_footer
      %s20 = sadd.s32 1, %s16
    $region7: #{tpu_custom_call.1} parent=1 // loop_footer_branch
      %15 = sbr.rel target = $region3
    $region8: #{tpu_custom_call.1} parent=1 // loop_exit
      _
    %371 = vsyncpa [#allocation4], 1
    %s372 = scalar_lea.sflag [#allocation4], 1
    %373 = vsyncpa %s372, 1
    %374 = vsyncpa [#allocation7], 1
    %375 = vsyncpa [#allocation5], 1
    %s376 = scalar_lea.sflag [#allocation5], 1
    %377 = vsyncpa %s376, 1

</llo_original>
